<compile_context>
chip_gen: v6e
topology: v6e:2x2x1
jax: 0.10.0
libtpu: 0.0.40
codegen_flags: <defaults>
</compile_context>

<pallas_src>
import functools

import jax
import jax.numpy as jnp
from jax import lax
from jax.experimental import pallas as pl
from jax.experimental.pallas import tpu as pltpu


def self_attention_kernel(x_ref, wqkv_ref, bqkv_ref, out_ref, *, scale):
    x = x_ref[...].astype(jnp.float32)                                  # (C, S)

    # 1x1 conv (qkv projection) as three clean matmuls from pre-split weight
    # planes: (C, C) @ (C, S) + (C, 1) -> (C, S) each.
    # TODO(synk): on v6e/v7x cast matmul operands to bf16 (f32 accumulate) for
    # MXU-native throughput; kept f32 here for exact parity with the reference.
    q = jnp.dot(wqkv_ref[0], x, preferred_element_type=jnp.float32) + bqkv_ref[0]
    k = jnp.dot(wqkv_ref[1], x, preferred_element_type=jnp.float32) + bqkv_ref[1]
    v = jnp.dot(wqkv_ref[2], x, preferred_element_type=jnp.float32) + bqkv_ref[2]

    # Channel-attention logits: q @ k^T -> (C, C), contracting over spatial.
    logits = lax.dot_general(q, k, (((1,), (1,)), ((), ())),
                             preferred_element_type=jnp.float32) * scale

    # Row softmax (torch.nn.Softmax(dim=-1)), numerically stable.
    m = jnp.max(logits, axis=-1, keepdims=True)
    e = jnp.exp(logits - m)
    attn = e / jnp.sum(e, axis=-1, keepdims=True)

    # (C, C) @ (C, S) -> (C, S): lane-dense output; fuse the residual add.
    out = jnp.dot(attn, v, preferred_element_type=jnp.float32) + x
    out_ref[...] = out.astype(out_ref.dtype)


def self_attention_forward(x_nchw, params):
    """x_nchw: (N, C, H, W). Returns (N, C, H, W)."""
    N, C, H, W = x_nchw.shape
    S = H * W
    x2 = x_nchw.reshape(N, C, S)                 # free reshape: N x C x (H*W)

    # Trace-time split of the fused qkv conv params into q/k/v planes.
    wqkv3 = params["wqkv"].reshape(3, C, C)      # (3C, C) -> (3, C, C)
    bqkv3 = params["bqkv"].reshape(3, C, 1)      # (3C,)   -> (3, C, 1)

    scale = 1.0 / (C ** 0.5)
    kernel = functools.partial(self_attention_kernel, scale=scale)

    # One grid step per batch element; batch is fully independent -> "parallel".
    # TODO(synk): for production sizes (large H*W or C) add a spatial grid axis
    # that accumulates q@k^T over S-tiles to bound VMEM on v7x (64 MiB).
    out = pl.pallas_call(
        kernel,
        out_shape=jax.ShapeDtypeStruct((N, C, S), x_nchw.dtype),
        grid_spec=pltpu.PrefetchScalarGridSpec(
            num_scalar_prefetch=0,
            grid=(N,),
            in_specs=[
                pl.BlockSpec((None, C, S), lambda n: (n, 0, 0)),   # x (per batch)
                pl.BlockSpec((3, C, C), lambda n: (0, 0, 0)),      # qkv weights
                pl.BlockSpec((3, C, 1), lambda n: (0, 0, 0)),      # qkv biases
            ],
            out_specs=pl.BlockSpec((None, C, S), lambda n: (n, 0, 0)),
        ),
        compiler_params=pltpu.CompilerParams(
            dimension_semantics=("parallel",)),
    )(x2, wqkv3, bqkv3)

    return out.reshape(N, C, H, W)


def reference_forward(x_nchw, params):
    """Pure-JAX (XLA) reference matching the PyTorch forward."""
    N, C, H, W = x_nchw.shape
    S = H * W
    x2 = x_nchw.reshape(N, C, S)
    qkv = jnp.einsum("ncs,dc->nds", x2, params["wqkv"]) + params["bqkv"][None, :, None]
    q, k, v = qkv[:, 0:C], qkv[:, C:2 * C], qkv[:, 2 * C:3 * C]
    logits = jnp.einsum("ncs,nds->ncd", q, k) / (C ** 0.5)
    attn = jax.nn.softmax(logits, axis=-1)
    out = jnp.einsum("ncd,nds->ncs", attn, v) + x2
    return out.reshape(N, C, H, W)


def init_params(key, channels):
    k1, k2 = jax.random.split(key, 2)
    s = 0.1
    return {
        # qkv 1x1 conv: weight (3C, C) (PyTorch (3C, C, 1, 1) squeezed), bias (3C,).
        "wqkv": s * jax.random.normal(k1, (3 * channels, channels), jnp.float32),
        "bqkv": s * jax.random.normal(k2, (3 * channels,), jnp.float32),
    }


if __name__ == "__main__":
    # SelfAttention(channels=4, activation=ReLU) at small shapes.
    N, C, H, W = 2, 4, 16, 16

    key = jax.random.PRNGKey(0)
    kx, kp = jax.random.split(key, 2)
    x = jax.random.normal(kx, (N, C, H, W), jnp.float32)   # NCHW like PyTorch
    params = init_params(kp, C)

    out = self_attention_forward(x, params)
    out = jax.block_until_ready(out)

    ref = jax.block_until_ready(reference_forward(x, params))
    assert out.shape == (N, C, H, W)
    assert jnp.allclose(out, ref, atol=1e-4, rtol=1e-4), \
        f"max abs err = {jnp.max(jnp.abs(out - ref))}"

    print("KERNEL_OK")
</pallas_src>

<mosaic_0001>
module attributes {stable_mosaic.version = 11 : i64} {
  func.func @self_attention_kernel(%arg0: i32, %arg1: memref<1x4x256xf32, #tpu.memory_space<vmem>>, %arg2: memref<3x4x4xf32, #tpu.memory_space<vmem>>, %arg3: memref<3x4x1xf32, #tpu.memory_space<vmem>>, %arg4: memref<1x4x256xf32, #tpu.memory_space<vmem>>) attributes {dimension_semantics = [#tpu.dimension_semantics<parallel>], iteration_bounds = array<i64: 2>, scalar_prefetch = 0 : i64, scratch_operands = 0 : i64, tpu.core_type = #tpu.core_type<tc>, window_params = [{transform_indices = @transform_0, window_bounds = array<i64: 1, 4, 256>}, {pipeline_mode = #tpu.pipeline_mode<synchronous>, transform_indices = @transform_1, window_bounds = array<i64: 3, 4, 4>}, {pipeline_mode = #tpu.pipeline_mode<synchronous>, transform_indices = @transform_2, window_bounds = array<i64: 3, 4, 1>}, {transform_indices = @transform_3, window_bounds = array<i64: 1, 4, 256>}]} {
    %c0 = arith.constant 0 : index
    %c0_0 = arith.constant 0 : index
    %c0_1 = arith.constant 0 : index
    %0 = vector.load %arg1[%c0, %c0_0, %c0_1] : memref<1x4x256xf32, #tpu.memory_space<vmem>>, vector<1x4x256xf32>
    %1 = vector.shape_cast %0 : vector<1x4x256xf32> to vector<4x256xf32>
    %c0_2 = arith.constant 0 : index
    %c0_3 = arith.constant 0 : index
    %c0_4 = arith.constant 0 : index
    %2 = vector.load %arg2[%c0_2, %c0_3, %c0_4] : memref<3x4x4xf32, #tpu.memory_space<vmem>>, vector<1x4x4xf32>
    %3 = vector.shape_cast %2 : vector<1x4x4xf32> to vector<4x4xf32>
    %cst = arith.constant dense<0.000000e+00> : vector<4x256xf32>
    %4 = tpu.matmul %3, %1, %cst {dimension_numbers = #tpu.dot_dimension_numbers<[1], [0], [0], [1], [0, 0, 1, 1], [], []>} : vector<4x4xf32>, vector<4x256xf32>, vector<4x256xf32> -> vector<4x256xf32>
    %c0_5 = arith.constant 0 : index
    %c0_6 = arith.constant 0 : index
    %c0_7 = arith.constant 0 : index
    %5 = vector.load %arg3[%c0_5, %c0_6, %c0_7] : memref<3x4x1xf32, #tpu.memory_space<vmem>>, vector<1x4x1xf32>
    %6 = vector.shape_cast %5 : vector<1x4x1xf32> to vector<4x1xf32>
    %7 = vector.broadcast %6 : vector<4x1xf32> to vector<4x256xf32>
    %8 = arith.addf %4, %7 : vector<4x256xf32>
    %c1 = arith.constant 1 : index
    %c0_8 = arith.constant 0 : index
    %c0_9 = arith.constant 0 : index
    %9 = vector.load %arg2[%c1, %c0_8, %c0_9] : memref<3x4x4xf32, #tpu.memory_space<vmem>>, vector<1x4x4xf32>
    %10 = vector.shape_cast %9 : vector<1x4x4xf32> to vector<4x4xf32>
    %cst_10 = arith.constant dense<0.000000e+00> : vector<4x256xf32>
    %11 = tpu.matmul %10, %1, %cst_10 {dimension_numbers = #tpu.dot_dimension_numbers<[1], [0], [0], [1], [0, 0, 1, 1], [], []>} : vector<4x4xf32>, vector<4x256xf32>, vector<4x256xf32> -> vector<4x256xf32>
    %c1_11 = arith.constant 1 : index
    %c0_12 = arith.constant 0 : index
    %c0_13 = arith.constant 0 : index
    %12 = vector.load %arg3[%c1_11, %c0_12, %c0_13] : memref<3x4x1xf32, #tpu.memory_space<vmem>>, vector<1x4x1xf32>
    %13 = vector.shape_cast %12 : vector<1x4x1xf32> to vector<4x1xf32>
    %14 = vector.broadcast %13 : vector<4x1xf32> to vector<4x256xf32>
    %15 = arith.addf %11, %14 : vector<4x256xf32>
    %c2 = arith.constant 2 : index
    %c0_14 = arith.constant 0 : index
    %c0_15 = arith.constant 0 : index
    %16 = vector.load %arg2[%c2, %c0_14, %c0_15] : memref<3x4x4xf32, #tpu.memory_space<vmem>>, vector<1x4x4xf32>
    %17 = vector.shape_cast %16 : vector<1x4x4xf32> to vector<4x4xf32>
    %cst_16 = arith.constant dense<0.000000e+00> : vector<4x256xf32>
    %18 = tpu.matmul %17, %1, %cst_16 {dimension_numbers = #tpu.dot_dimension_numbers<[1], [0], [0], [1], [0, 0, 1, 1], [], []>} : vector<4x4xf32>, vector<4x256xf32>, vector<4x256xf32> -> vector<4x256xf32>
    %c2_17 = arith.constant 2 : index
    %c0_18 = arith.constant 0 : index
    %c0_19 = arith.constant 0 : index
    %19 = vector.load %arg3[%c2_17, %c0_18, %c0_19] : memref<3x4x1xf32, #tpu.memory_space<vmem>>, vector<1x4x1xf32>
    %20 = vector.shape_cast %19 : vector<1x4x1xf32> to vector<4x1xf32>
    %21 = vector.broadcast %20 : vector<4x1xf32> to vector<4x256xf32>
    %22 = arith.addf %18, %21 : vector<4x256xf32>
    %cst_20 = arith.constant dense<0.000000e+00> : vector<4x4xf32>
    %23 = tpu.matmul %8, %15, %cst_20 {dimension_numbers = #tpu.dot_dimension_numbers<[1], [1], [0], [0], [0, 0, 1, 0], [], []>} : vector<4x256xf32>, vector<4x256xf32>, vector<4x4xf32> -> vector<4x4xf32>
    %cst_21 = arith.constant 5.000000e-01 : f32
    %24 = vector.broadcast %cst_21 : f32 to vector<4x4xf32>
    %25 = arith.mulf %23, %24 : vector<4x4xf32>
    %cst_22 = arith.constant dense<0xFF800000> : vector<4xf32>
    %26 = vector.multi_reduction <maximumf>, %25, %cst_22 [1] : vector<4x4xf32> to vector<4xf32>
    %27 = vector.shape_cast %26 : vector<4xf32> to vector<4x1xf32>
    %28 = vector.broadcast %27 : vector<4x1xf32> to vector<4x4xf32>
    %29 = arith.subf %25, %28 : vector<4x4xf32>
    %30 = math.exp %29 : vector<4x4xf32>
    %cst_23 = arith.constant dense<0.000000e+00> : vector<4xf32>
    %31 = vector.multi_reduction <add>, %30, %cst_23 [1] : vector<4x4xf32> to vector<4xf32>
    %32 = vector.shape_cast %31 : vector<4xf32> to vector<4x1xf32>
    %33 = vector.broadcast %32 : vector<4x1xf32> to vector<4x4xf32>
    %34 = arith.divf %30, %33 : vector<4x4xf32>
    %cst_24 = arith.constant dense<0.000000e+00> : vector<4x256xf32>
    %35 = tpu.matmul %34, %22, %cst_24 {dimension_numbers = #tpu.dot_dimension_numbers<[1], [0], [0], [1], [0, 0, 1, 1], [], []>} : vector<4x4xf32>, vector<4x256xf32>, vector<4x256xf32> -> vector<4x256xf32>
    %36 = arith.addf %35, %1 : vector<4x256xf32>
    %c0_25 = arith.constant 0 : index
    %c0_26 = arith.constant 0 : index
    %c0_27 = arith.constant 0 : index
    %37 = vector.load %arg4[%c0_25, %c0_26, %c0_27] : memref<1x4x256xf32, #tpu.memory_space<vmem>>, vector<1x4x256xf32>
    %38 = vector.shape_cast %37 : vector<1x4x256xf32> to vector<4x256xf32>
    %39 = vector.shape_cast %36 : vector<4x256xf32> to vector<1x4x256xf32>
    tpu.vector_store %arg4[%c0_25, %c0_26, %c0_27], %39 {strides = array<i32>} : memref<1x4x256xf32, #tpu.memory_space<vmem>>, vector<1x4x256xf32>,
    return
  }
  func.func @transform_0(%arg0: i32) -> (i32, i32, i32) {
    %c0_i32 = arith.constant 0 : i32
    %c0_i32_0 = arith.constant 0 : i32
    %c0_i32_1 = arith.constant 0 : i32
    return %arg0, %c0_i32, %c0_i32_0 : i32, i32, i32
  }
  func.func @transform_1(%arg0: i32) -> (i32, i32, i32) {
    %c0_i32 = arith.constant 0 : i32
    %c0_i32_0 = arith.constant 0 : i32
    %c0_i32_1 = arith.constant 0 : i32
    %c0_i32_2 = arith.constant 0 : i32
    return %c0_i32, %c0_i32_0, %c0_i32_1 : i32, i32, i32
  }
  func.func @transform_2(%arg0: i32) -> (i32, i32, i32) {
    %c0_i32 = arith.constant 0 : i32
    %c0_i32_0 = arith.constant 0 : i32
    %c0_i32_1 = arith.constant 0 : i32
    %c0_i32_2 = arith.constant 0 : i32
    return %c0_i32, %c0_i32_0, %c0_i32_1 : i32, i32, i32
  }
  func.func @transform_3(%arg0: i32) -> (i32, i32, i32) {
    %c0_i32 = arith.constant 0 : i32
    %c0_i32_0 = arith.constant 0 : i32
    %c0_i32_1 = arith.constant 0 : i32
    return %arg0, %c0_i32, %c0_i32_0 : i32, i32, i32
  }
}

</mosaic_0001>

<llo_original>
// kernel: tpu_custom_call.1
$region0: #{tpu_custom_call.1}
  #allocation0 [shape = 'u32[]', space=smem, size = 0x4, offset = 0x4, fixed_abs, tag = 'smem constant byte address 0x4 - core index']
  #allocation1 [shape = 'u32[144,128]{1,0:T(1,128)}', space=vmem, size = 0x12000, scoped, tag = 'internal scratch']
  %s0 = inlined_call_operand.hbm [shape: f32[2,4,256], index: 0, kind: input, shape index: {}]
  %s1 = inlined_call_operand.vmem [shape: f32[3,4,4], index: 1, kind: input, shape index: {}]
  %s2 = inlined_call_operand.vmem [shape: f32[3,4,1], index: 2, kind: input, shape index: {}]
  %s3 = inlined_call_operand.hbm [shape: f32[2,4,256], index: 3, kind: output, shape index: {}]
  %s4 = sld [smem:[#allocation0]]
  $region49: #{tpu_custom_call.1} parent=0
    _
  %s6 = ssub.s32 1, %s4
  %s7 = scalar_select 0, %s6, %s4
  $region1: #{tpu_custom_call.1} parent=0
    #allocation2 [shape = 'u8[8192]{0}', space=vmem, size = 0x2000, scoped, tag = 'input window, operand 0']
    #allocation3 [shape = 's32[2]{0}', space=sflag, size = 0x8, scoped, tag = 'scoped memory for tpu_custom_call.1']
    #allocation4 [shape = 's32[2]{0}', space=sflag, size = 0x8, scoped, tag = 'scoped memory for tpu_custom_call.1']
    #allocation5 [shape = 'u8[8192]{0}', space=vmem, size = 0x2000, scoped, tag = 'output window, operand 0']
    %8 = vsyncpa [#allocation3], 0
    %s9 = scalar_lea.sflag [#allocation3], 1
    %10 = vsyncpa %s9, 0
    %11 = vsyncpa [#allocation4], 0
    %s12 = scalar_lea.sflag [#allocation4], 1
    %13 = vsyncpa %s12, 0
    loop: start=0, step=1, limit=4
    $region2: #{tpu_custom_call.1} parent=1 // loop_pre_header
      _
    $region3: #{tpu_custom_call.1} parent=1 // loop_header
      %s15 = sphi 0, %s19
      %p16 = scmp.ge.s32.totalorder %s15, 4
      %s25 = sphi 0, %s27
      %s28 = sphi 0, %s25
      %s29 = sphi 0, %s28
      %s45 = sphi 0, %s29
      %s49 = sphi 0, %s49
      %s51 = sphi 0, %s49
      %s52 = sphi 0, %s51
      %s66 = sphi 0, %s52
      %s70 = sphi 0, %s70
      %s72 = sphi 0, %s70
      %s73 = sphi 0, %s72
      %s87 = sphi 0, %s73
      %s93 = sphi 0, %s95
      %s96 = sphi 0, %s93
      %s97 = sphi 0, %s96
      %s113 = sphi 0, %s97
    $region4: #{tpu_custom_call.1} parent=1 // loop_header_branch
      %18 = sbr.rel (%p16) target = $region8
    $region5: #{tpu_custom_call.1} parent=1 // loop_body
      %s20 = ssub.s32 %s15, 1
      %s21 = ssub.s32 %s15, 2
      %s22 = sadd.s32 %s15, 1
      %s23 = ssub.s32 %s15, %s22
      %p24 = scmp.eq.s32.totalorder %s23, 0
      %s26 = sadd.s32 %s25, 1
      %s27 = scalar_select %p24, %s25, %s26
      %p30 = pneg %p24
      %p31 = scmp.eq.s32.totalorder %s15, 1
      %p32 = por %p30, %p31
      %p33 = scmp.ne.s32.totalorder %s25, %s28
      %p34 = scmp.eq.s32.totalorder %s15, 0
      %p35 = por %p33, %p34
      %p36 = scmp.ne.s32.totalorder %s25, %s28
      %p37 = scmp.eq.s32.totalorder %s20, 1
      %p38 = por %p36, %p37
      %p39 = scmp.ne.s32.totalorder %s28, %s29
      %p40 = scmp.eq.s32.totalorder %s20, 0
      %p41 = por %p39, %p40
      %p42 = scmp.ne.s32.totalorder %s28, %s29
      %p43 = scmp.eq.s32.totalorder %s21, 1
      %p44 = por %p42, %p43
      %p46 = scmp.ne.s32.totalorder %s29, %s45
      %p47 = scmp.eq.s32.totalorder %s21, 0
      %p48 = por %p46, %p47
      %s50 = sadd.s32 %s49, 1
      %p53 = scmp.eq.s32.totalorder %s15, 1
      %p54 = scmp.ne.s32.totalorder %s49, %s51
      %p55 = scmp.eq.s32.totalorder %s15, 0
      %p56 = por %p54, %p55
      %p57 = scmp.ne.s32.totalorder %s49, %s51
      %p58 = scmp.eq.s32.totalorder %s20, 1
      %p59 = por %p57, %p58
      %p60 = scmp.ne.s32.totalorder %s51, %s52
      %p61 = scmp.eq.s32.totalorder %s20, 0
      %p62 = por %p60, %p61
      %p63 = scmp.ne.s32.totalorder %s51, %s52
      %p64 = scmp.eq.s32.totalorder %s21, 1
      %p65 = por %p63, %p64
      %p67 = scmp.ne.s32.totalorder %s52, %s66
      %p68 = scmp.eq.s32.totalorder %s21, 0
      %p69 = por %p67, %p68
      %s71 = sadd.s32 %s70, 1
      %p74 = scmp.eq.s32.totalorder %s15, 1
      %p75 = scmp.ne.s32.totalorder %s70, %s72
      %p76 = scmp.eq.s32.totalorder %s15, 0
      %p77 = por %p75, %p76
      %p78 = scmp.ne.s32.totalorder %s70, %s72
      %p79 = scmp.eq.s32.totalorder %s20, 1
      %p80 = por %p78, %p79
      %p81 = scmp.ne.s32.totalorder %s72, %s73
      %p82 = scmp.eq.s32.totalorder %s20, 0
      %p83 = por %p81, %p82
      %p84 = scmp.ne.s32.totalorder %s72, %s73
      %p85 = scmp.eq.s32.totalorder %s21, 1
      %p86 = por %p84, %p85
      %p88 = scmp.ne.s32.totalorder %s73, %s87
      %p89 = scmp.eq.s32.totalorder %s21, 0
      %p90 = por %p88, %p89
      %s91 = ssub.s32 %s15, %s22
      %p92 = scmp.eq.s32.totalorder %s91, 0
      %s94 = sadd.s32 %s93, 1
      %s95 = scalar_select %p92, %s93, %s94
      %p98 = pneg %p92
      %p99 = scmp.eq.s32.totalorder %s15, 1
      %p100 = por %p98, %p99
      %p101 = scmp.ne.s32.totalorder %s93, %s96
      %p102 = scmp.eq.s32.totalorder %s15, 0
      %p103 = por %p101, %p102
      %p104 = scmp.ne.s32.totalorder %s93, %s96
      %p105 = scmp.eq.s32.totalorder %s20, 1
      %p106 = por %p104, %p105
      %p107 = scmp.ne.s32.totalorder %s96, %s97
      %p108 = scmp.eq.s32.totalorder %s20, 0
      %p109 = por %p107, %p108
      %p110 = scmp.ne.s32.totalorder %s96, %s97
      %p111 = scmp.eq.s32.totalorder %s21, 1
      %p112 = por %p110, %p111
      %p114 = scmp.ne.s32.totalorder %s97, %s113
      %p115 = scmp.eq.s32.totalorder %s21, 0
      %p116 = por %p114, %p115
      %p117 = scmp.le.s32.totalorder 1, %s15
      %p118 = scmp.lt.s32.totalorder %s15, 3
      %p119 = pnand %p117, %p118
      %p120 = pneg %p119
      // Predicated region
      $region9: #{tpu_custom_call.1} parent=5 // pred_check
        _
      $region10: #{tpu_custom_call.1} parent=5 // pred_check_branch
        %122 = sbr.rel (%p119) target = $region12
      $region11: #{tpu_custom_call.1} parent=5 // pred_region
        %s123 = ssub.s32 %s15, 1
        // Predicated region
        $region13: #{tpu_custom_call.1} parent=11 // pred_check
          %p124 = pneg %p62
        $region14: #{tpu_custom_call.1} parent=11 // pred_check_branch
          %126 = sbr.rel (%p124) target = $region16
        $region15: #{tpu_custom_call.1} parent=11 // pred_region
          _
        $region16: #{tpu_custom_call.1} parent=11 // pred_fallthru
          _
        // Predicated region
        $region17: #{tpu_custom_call.1} parent=11 // pred_check
          %p127 = pneg %p83
        $region18: #{tpu_custom_call.1} parent=11 // pred_check_branch
          %129 = sbr.rel (%p127) target = $region20
        $region19: #{tpu_custom_call.1} parent=11 // pred_region
          _
        $region20: #{tpu_custom_call.1} parent=11 // pred_fallthru
          _
      $region12: #{tpu_custom_call.1} parent=5 // pred_fallthru
        _
      %p130 = scmp.lt.s32.totalorder %s15, 2
      // Predicated region
      $region21: #{tpu_custom_call.1} parent=5 // pred_check
        %p131 = pneg %p130
      $region22: #{tpu_custom_call.1} parent=5 // pred_check_branch
        %133 = sbr.rel (%p131) target = $region24
      $region23: #{tpu_custom_call.1} parent=5 // pred_region
        // Predicated region
        $region25: #{tpu_custom_call.1} parent=23 // pred_check
          %p134 = pneg %p35
        $region26: #{tpu_custom_call.1} parent=23 // pred_check_branch
          %136 = sbr.rel (%p134) target = $region28
        $region27: #{tpu_custom_call.1} parent=23 // pred_region
          %s137 = sand.u32 %s25, 1
          %s138 = scalar_lea.sflag [#allocation3], %s137
          %s139 = sand.u32 %s25, 1
          %s140 = smul.addr %s139, 8
          %s141 = scalar_lea.vmem [#allocation2], %s140
          %s143 = ssub.s32 128, 128
          %144 = vsyncadd %s138, %s143
          %s145 = smul.addr %s15, 2
          %s146 = smul.addr %s145, 64
          %s147 = scalar_lea.hbm %s0, %s146
          %s149 = sshll.u32 %s141, 4
          %s150 = int_to_ptr.vmem [resolvable:$true] %s149
          %152 = dma.hbm_to_vmem [thread:$0]  %s147, 128, %s150, %s138
        $region28: #{tpu_custom_call.1} parent=23 // pred_fallthru
          _
      $region24: #{tpu_custom_call.1} parent=5 // pred_fallthru
        _
      %p153 = scmp.le.s32.totalorder 1, %s15
      %p154 = scmp.lt.s32.totalorder %s15, 3
      %p155 = pnand %p153, %p154
      %p156 = pneg %p155
      // Predicated region
      $region29: #{tpu_custom_call.1} parent=5 // pred_check
        _
      $region30: #{tpu_custom_call.1} parent=5 // pred_check_branch
        %158 = sbr.rel (%p155) target = $region32
      $region31: #{tpu_custom_call.1} parent=5 // pred_region
        %s159 = ssub.s32 %s15, 1
        %s160 = sand.u32 %s28, 1
        %s161 = scalar_lea.sflag [#allocation3], %s160
        %s162 = sand.u32 %s28, 1
        %s163 = smul.addr %s162, 8
        %s164 = scalar_lea.vmem [#allocation2], %s163
        // Predicated region
        $region33: #{tpu_custom_call.1} parent=31 // pred_check
          %p165 = pneg %p41
        $region34: #{tpu_custom_call.1} parent=31 // pred_check_branch
          %167 = sbr.rel (%p165) target = $region36
        $region35: #{tpu_custom_call.1} parent=31 // pred_region
          %168 = dma.done %s161, 128
        $region36: #{tpu_custom_call.1} parent=31 // pred_fallthru
          _
        %s169 = sand.u32 %s28, 1
        %s170 = scalar_lea.sflag [#allocation3], %s169
        %s171 = sand.u32 %s28, 1
        %s172 = smul.addr %s171, 8
        %s173 = scalar_lea.vmem [#allocation2], %s172
        %p174 = pneg %p41
        %p175 = pneg %p38
        %p176 = pneg %p62
        %p177 = pneg %p59
        %p178 = pneg %p83
        %p179 = pneg %p80
        %p180 = pneg %p109
        %p181 = pneg %p106
        %s182 = sand.u32 %s96, 1
        %s183 = scalar_lea.sflag [#allocation4], %s182
        %s184 = sand.u32 %s96, 1
        %s185 = smul.addr %s184, 8
        %s186 = scalar_lea.vmem [#allocation5], %s185
        %v187 = vld [vmem:[%s164] sm:$0xff]
        %v188 = vld [vmem:[%s1] sm:$0xf]
        %v189 = vld [vmem:[%s2] sm:$0xf]
        %191 = vset.pattern.permute.xlu0 0
        %192 = vperm.xlu0 %191, %v189
        %v193 = vpop.permute.xlu0 %192
        %v196 = vcombine.high %v187, %v187
        %vm197 = vcmask 31744
        %v199 = vsel %vm197, %v188, 0
        %vm201 = vcmask 1043456
        %v202 = vsel %vm201, %v187, 0
        %v204 = vsel %vm201, %v196, 0
        %206 = vmatprep.subr.mxu0 0.0
        %207 = vmatpush1.msra.mxu0 0.0
        %208 = vmatprep.subr.mxu0 0.0
        %209 = vmatpush1.msra.mxu0 0.0
        %210 = vmatprep.subr.mxu0 0.0
        %211 = vmatpush1.msra.mxu0 0.0
        %212 = vmatprep.subr.mxu0 0.0
        %213 = vmatpush1.msra.mxu0 0.0
        %214 = vmatprep.subr.mxu0 0.0
        %215 = vmatpush1.msra.mxu0 0.0
        %216 = vmatprep.subr.mxu0 0.0
        %217 = vmatpush1.msra.mxu0 0.0
        %218 = vmatprep.subr.mxu0 0.0
        %219 = vmatpush1.msra.mxu0 0.0
        %220 = vmatprep.subr.mxu0 0.0
        %221 = vmatpush1.msra.mxu0 0.0
        %222 = vmatprep.subr.mxu0 0.0
        %223 = vmatpush1.msra.mxu0 0.0
        %224 = vmatprep.subr.mxu0 0.0
        %225 = vmatpush1.msra.mxu0 0.0
        %226 = vmatprep.subr.mxu0 0.0
        %227 = vmatpush1.msra.mxu0 0.0
        %228 = vmatprep.subr.mxu0 0.0
        %229 = vmatpush1.msra.mxu0 0.0
        %230 = vmatprep.subr.mxu0 0.0
        %231 = vmatpush1.msra.mxu0 0.0
        %232 = vmatprep.subr.mxu0 0.0
        %233 = vmatpush1.msra.mxu0 0.0
        %234 = vmatprep.subr.mxu0 0.0
        %235 = vmatpush1.msra.mxu0 0.0
        %236 = vmatprep.subr.mxu0 %v204
        %237 = vmatpush1.msra.mxu0 %v202
        %238 = vmatprep.subr.mxu0 0.0
        %239 = vmatpush2.msra.mxu0 0.0
        %240 = vmatprep.subr.mxu0 0.0
        %241 = vmatpush2.msra.mxu0 0.0
        %242 = vmatprep.subr.mxu0 0.0
        %243 = vmatpush2.msra.mxu0 0.0
        %244 = vmatprep.subr.mxu0 0.0
        %245 = vmatpush2.msra.mxu0 0.0
        %246 = vmatprep.subr.mxu0 0.0
        %247 = vmatpush2.msra.mxu0 0.0
        %248 = vmatprep.subr.mxu0 0.0
        %249 = vmatpush2.msra.mxu0 0.0
        %250 = vmatprep.subr.mxu0 0.0
        %251 = vmatpush2.msra.mxu0 0.0
        %252 = vmatprep.subr.mxu0 0.0
        %253 = vmatpush2.msra.mxu0 0.0
        %254 = vmatprep.subr.mxu0 0.0
        %255 = vmatpush2.msra.mxu0 0.0
        %256 = vmatprep.subr.mxu0 0.0
        %257 = vmatpush2.msra.mxu0 0.0
        %258 = vmatprep.subr.mxu0 0.0
        %259 = vmatpush2.msra.mxu0 0.0
        %260 = vmatprep.subr.mxu0 0.0
        %261 = vmatpush2.msra.mxu0 0.0
        %262 = vmatprep.subr.mxu0 0.0
        %263 = vmatpush2.msra.mxu0 0.0
        %264 = vmatprep.subr.mxu0 0.0
        %265 = vmatpush2.msra.mxu0 0.0
        %266 = vmatprep.subr.mxu0 0.0
        %267 = vmatpush2.msra.mxu0 0.0
        %268 = vmatprep.subr.mxu0 0.0
        %269 = vmatpush2.msra.mxu0 0.0
        %270 = vmatprep.mubr.f32.mxu0 0.0
        %271 = vmatmul.mubr.f32.gmra.mxu0 %v199
        %v272 = vpop.f32.mrf.mxu0
        %v273 = vadd.f32 %v193, %v272
        %v274 = vpop.f32.mrf.mxu0
        %v275 = vadd.f32 %v193, %v274
        %276 = vdwg.mxu0
        %s277 = scalar_lea.vmem %s1, 4
        %v278 = vld [vmem:[%s277] sm:$0xf]
        %s279 = scalar_lea.vmem %s2, 4
        %v280 = vld [vmem:[%s279] sm:$0xf]
        %282 = vset.pattern.permute.xlu0 0
        %283 = vperm.xlu0 %282, %v280
        %v284 = vpop.permute.xlu0 %283
        %v287 = vsel %vm197, %v278, 0
        %289 = vmatprep.subr.mxu0 0.0
        %290 = vmatpush1.msra.mxu0 0.0
        %291 = vmatprep.subr.mxu0 0.0
        %292 = vmatpush1.msra.mxu0 0.0
        %293 = vmatprep.subr.mxu0 0.0
        %294 = vmatpush1.msra.mxu0 0.0
        %295 = vmatprep.subr.mxu0 0.0
        %296 = vmatpush1.msra.mxu0 0.0
        %297 = vmatprep.subr.mxu0 0.0
        %298 = vmatpush1.msra.mxu0 0.0
        %299 = vmatprep.subr.mxu0 0.0
        %300 = vmatpush1.msra.mxu0 0.0
        %301 = vmatprep.subr.mxu0 0.0
        %302 = vmatpush1.msra.mxu0 0.0
        %303 = vmatprep.subr.mxu0 0.0
        %304 = vmatpush1.msra.mxu0 0.0
        %305 = vmatprep.subr.mxu0 0.0
        %306 = vmatpush1.msra.mxu0 0.0
        %307 = vmatprep.subr.mxu0 0.0
        %308 = vmatpush1.msra.mxu0 0.0
        %309 = vmatprep.subr.mxu0 0.0
        %310 = vmatpush1.msra.mxu0 0.0
        %311 = vmatprep.subr.mxu0 0.0
        %312 = vmatpush1.msra.mxu0 0.0
        %313 = vmatprep.subr.mxu0 0.0
        %314 = vmatpush1.msra.mxu0 0.0
        %315 = vmatprep.subr.mxu0 0.0
        %316 = vmatpush1.msra.mxu0 0.0
        %317 = vmatprep.subr.mxu0 0.0
        %318 = vmatpush1.msra.mxu0 0.0
        %319 = vmatprep.subr.mxu0 %v204
        %320 = vmatpush1.msra.mxu0 %v202
        %321 = vmatprep.subr.mxu0 0.0
        %322 = vmatpush2.msra.mxu0 0.0
        %323 = vmatprep.subr.mxu0 0.0
        %324 = vmatpush2.msra.mxu0 0.0
        %325 = vmatprep.subr.mxu0 0.0
        %326 = vmatpush2.msra.mxu0 0.0
        %327 = vmatprep.subr.mxu0 0.0
        %328 = vmatpush2.msra.mxu0 0.0
        %329 = vmatprep.subr.mxu0 0.0
        %330 = vmatpush2.msra.mxu0 0.0
        %331 = vmatprep.subr.mxu0 0.0
        %332 = vmatpush2.msra.mxu0 0.0
        %333 = vmatprep.subr.mxu0 0.0
        %334 = vmatpush2.msra.mxu0 0.0
        %335 = vmatprep.subr.mxu0 0.0
        %336 = vmatpush2.msra.mxu0 0.0
        %337 = vmatprep.subr.mxu0 0.0
        %338 = vmatpush2.msra.mxu0 0.0
        %339 = vmatprep.subr.mxu0 0.0
        %340 = vmatpush2.msra.mxu0 0.0
        %341 = vmatprep.subr.mxu0 0.0
        %342 = vmatpush2.msra.mxu0 0.0
        %343 = vmatprep.subr.mxu0 0.0
        %344 = vmatpush2.msra.mxu0 0.0
        %345 = vmatprep.subr.mxu0 0.0
        %346 = vmatpush2.msra.mxu0 0.0
        %347 = vmatprep.subr.mxu0 0.0
        %348 = vmatpush2.msra.mxu0 0.0
        %349 = vmatprep.subr.mxu0 0.0
        %350 = vmatpush2.msra.mxu0 0.0
        %351 = vmatprep.subr.mxu0 0.0
        %352 = vmatpush2.msra.mxu0 0.0
        %353 = vmatprep.mubr.f32.mxu0 0.0
        %354 = vmatmul.mubr.f32.gmra.mxu0 %v287
        %v355 = vpop.f32.mrf.mxu0
        %v356 = vadd.f32 %v284, %v355
        %v357 = vpop.f32.mrf.mxu0
        %v358 = vadd.f32 %v284, %v357
        %359 = vdwg.mxu0
        %s360 = scalar_lea.vmem %s1, 8
        %v361 = vld [vmem:[%s360] sm:$0xf]
        %s362 = scalar_lea.vmem %s2, 8
        %v363 = vld [vmem:[%s362] sm:$0xf]
        %365 = vset.pattern.permute.xlu0 0
        %366 = vperm.xlu0 %365, %v363
        %v367 = vpop.permute.xlu0 %366
        %v370 = vsel %vm197, %v361, 0
        %372 = vmatprep.subr.mxu0 0.0
        %373 = vmatpush1.msra.mxu0 0.0
        %374 = vmatprep.subr.mxu0 0.0
        %375 = vmatpush1.msra.mxu0 0.0
        %376 = vmatprep.subr.mxu0 0.0
        %377 = vmatpush1.msra.mxu0 0.0
        %378 = vmatprep.subr.mxu0 0.0
        %379 = vmatpush1.msra.mxu0 0.0
        %380 = vmatprep.subr.mxu0 0.0
        %381 = vmatpush1.msra.mxu0 0.0
        %382 = vmatprep.subr.mxu0 0.0
        %383 = vmatpush1.msra.mxu0 0.0
        %384 = vmatprep.subr.mxu0 0.0
        %385 = vmatpush1.msra.mxu0 0.0
        %386 = vmatprep.subr.mxu0 0.0
        %387 = vmatpush1.msra.mxu0 0.0
        %388 = vmatprep.subr.mxu0 0.0
        %389 = vmatpush1.msra.mxu0 0.0
        %390 = vmatprep.subr.mxu0 0.0
        %391 = vmatpush1.msra.mxu0 0.0
        %392 = vmatprep.subr.mxu0 0.0
        %393 = vmatpush1.msra.mxu0 0.0
        %394 = vmatprep.subr.mxu0 0.0
        %395 = vmatpush1.msra.mxu0 0.0
        %396 = vmatprep.subr.mxu0 0.0
        %397 = vmatpush1.msra.mxu0 0.0
        %398 = vmatprep.subr.mxu0 0.0
        %399 = vmatpush1.msra.mxu0 0.0
        %400 = vmatprep.subr.mxu0 0.0
        %401 = vmatpush1.msra.mxu0 0.0
        %402 = vmatprep.subr.mxu0 %v204
        %403 = vmatpush1.msra.mxu0 %v202
        %404 = vmatprep.subr.mxu0 0.0
        %405 = vmatpush2.msra.mxu0 0.0
        %406 = vmatprep.subr.mxu0 0.0
        %407 = vmatpush2.msra.mxu0 0.0
        %408 = vmatprep.subr.mxu0 0.0
        %409 = vmatpush2.msra.mxu0 0.0
        %410 = vmatprep.subr.mxu0 0.0
        %411 = vmatpush2.msra.mxu0 0.0
        %412 = vmatprep.subr.mxu0 0.0
        %413 = vmatpush2.msra.mxu0 0.0
        %414 = vmatprep.subr.mxu0 0.0
        %415 = vmatpush2.msra.mxu0 0.0
        %416 = vmatprep.subr.mxu0 0.0
        %417 = vmatpush2.msra.mxu0 0.0
        %418 = vmatprep.subr.mxu0 0.0
        %419 = vmatpush2.msra.mxu0 0.0
        %420 = vmatprep.subr.mxu0 0.0
        %421 = vmatpush2.msra.mxu0 0.0
        %422 = vmatprep.subr.mxu0 0.0
        %423 = vmatpush2.msra.mxu0 0.0
        %424 = vmatprep.subr.mxu0 0.0
        %425 = vmatpush2.msra.mxu0 0.0
        %426 = vmatprep.subr.mxu0 0.0
        %427 = vmatpush2.msra.mxu0 0.0
        %428 = vmatprep.subr.mxu0 0.0
        %429 = vmatpush2.msra.mxu0 0.0
        %430 = vmatprep.subr.mxu0 0.0
        %431 = vmatpush2.msra.mxu0 0.0
        %432 = vmatprep.subr.mxu0 0.0
        %433 = vmatpush2.msra.mxu0 0.0
        %434 = vmatprep.subr.mxu0 0.0
        %435 = vmatpush2.msra.mxu0 0.0
        %436 = vmatprep.mubr.f32.mxu0 0.0
        %437 = vmatmul.mubr.f32.gmra.mxu0 %v370
        %v438 = vpop.f32.mrf.mxu0
        %v439 = vadd.f32 %v367, %v438
        %v440 = vpop.f32.mrf.mxu0
        %v441 = vadd.f32 %v367, %v440
        %442 = vdwg.mxu0
        %443 = vmatprep.subr.mxu0 0.0
        %444 = vmatpush1.xpose.msra.mxu0 0.0
        %445 = vmatprep.subr.mxu0 0.0
        %446 = vmatpush1.xpose.msra.mxu0 0.0
        %447 = vmatprep.subr.mxu0 0.0
        %448 = vmatpush1.xpose.msra.mxu0 0.0
        %449 = vmatprep.subr.mxu0 0.0
        %450 = vmatpush1.xpose.msra.mxu0 0.0
        %451 = vmatprep.subr.mxu0 0.0
        %452 = vmatpush1.xpose.msra.mxu0 0.0
        %453 = vmatprep.subr.mxu0 0.0
        %454 = vmatpush1.xpose.msra.mxu0 0.0
        %455 = vmatprep.subr.mxu0 0.0
        %456 = vmatpush1.xpose.msra.mxu0 0.0
        %457 = vmatprep.subr.mxu0 0.0
        %458 = vmatpush1.xpose.msra.mxu0 0.0
        %459 = vmatprep.subr.mxu0 0.0
        %460 = vmatpush1.xpose.msra.mxu0 0.0
        %461 = vmatprep.subr.mxu0 0.0
        %462 = vmatpush1.xpose.msra.mxu0 0.0
        %463 = vmatprep.subr.mxu0 0.0
        %464 = vmatpush1.xpose.msra.mxu0 0.0
        %465 = vmatprep.subr.mxu0 0.0
        %466 = vmatpush1.xpose.msra.mxu0 0.0
        %467 = vmatprep.subr.mxu0 0.0
        %468 = vmatpush1.xpose.msra.mxu0 0.0
        %469 = vmatprep.subr.mxu0 0.0
        %470 = vmatpush1.xpose.msra.mxu0 0.0
        %471 = vmatprep.subr.mxu0 0.0
        %472 = vmatpush1.xpose.msra.mxu0 0.0
        %473 = vmatprep.subr.mxu0 %v358
        %474 = vmatpush1.xpose.msra.mxu0 %v356
        %475 = vmatprep.subr.mxu0 0.0
        %476 = vmatpush2.xpose.msra.mxu0 0.0
        %477 = vmatprep.subr.mxu0 0.0
        %478 = vmatpush2.xpose.msra.mxu0 0.0
        %479 = vmatprep.subr.mxu0 0.0
        %480 = vmatpush2.xpose.msra.mxu0 0.0
        %481 = vmatprep.subr.mxu0 0.0
        %482 = vmatpush2.xpose.msra.mxu0 0.0
        %483 = vmatprep.subr.mxu0 0.0
        %484 = vmatpush2.xpose.msra.mxu0 0.0
        %485 = vmatprep.subr.mxu0 0.0
        %486 = vmatpush2.xpose.msra.mxu0 0.0
        %487 = vmatprep.subr.mxu0 0.0
        %488 = vmatpush2.xpose.msra.mxu0 0.0
        %489 = vmatprep.subr.mxu0 0.0
        %490 = vmatpush2.xpose.msra.mxu0 0.0
        %491 = vmatprep.subr.mxu0 0.0
        %492 = vmatpush2.xpose.msra.mxu0 0.0
        %493 = vmatprep.subr.mxu0 0.0
        %494 = vmatpush2.xpose.msra.mxu0 0.0
        %495 = vmatprep.subr.mxu0 0.0
        %496 = vmatpush2.xpose.msra.mxu0 0.0
        %497 = vmatprep.subr.mxu0 0.0
        %498 = vmatpush2.xpose.msra.mxu0 0.0
        %499 = vmatprep.subr.mxu0 0.0
        %500 = vmatpush2.xpose.msra.mxu0 0.0
        %501 = vmatprep.subr.mxu0 0.0
        %502 = vmatpush2.xpose.msra.mxu0 0.0
        %503 = vmatprep.subr.mxu0 0.0
        %504 = vmatpush2.xpose.msra.mxu0 0.0
        %505 = vmatprep.subr.mxu0 0.0
        %506 = vmatpush2.xpose.msra.mxu0 0.0
        %507 = vmatprep.mubr.f32.mxu0 %v275
        %508 = vmatmul.mubr.f32.gmra.mxu0 %v273
        %v509 = vpop.f32.mrf.mxu0
        %v510 = vadd.f32 0.0, %v509
        %v511 = vpop.f32.mrf.mxu0
        %512 = vdwg.mxu0
        %v513 = vmul.f32 %v510, 0.5
        %vm514 = vcmask 27648
        %v515 = vsel %vm514, %v513, -inf
        %516 = vmax.xlane.f32.xlu0 %v515
        %v517 = vpop.xlane.xlu0 %516
        %v518 = vsub.f32 %v513, %v517
        %v519 = vmul.f32 %v518, 1.442695
        %v520 = vpow.pop %v519
        %v521 = vsel %vm514, %v520, 0.0
        %522 = vadd.xlane.f32.xlu0 %v521
        %v523 = vpop.xlane.xlu0 %522
        %v524 = vrcp.pop %v523
        %v525 = vmul.f32 %v520, %v524
        %v528 = vsel %vm197, %v525, 0
        %v531 = vsel %vm201, %v439, 0
        %v534 = vsel %vm201, %v441, 0
        %536 = vmatprep.subr.mxu0 0.0
        %537 = vmatpush1.msra.mxu0 0.0
        %538 = vmatprep.subr.mxu0 0.0
        %539 = vmatpush1.msra.mxu0 0.0
        %540 = vmatprep.subr.mxu0 0.0
        %541 = vmatpush1.msra.mxu0 0.0
        %542 = vmatprep.subr.mxu0 0.0
        %543 = vmatpush1.msra.mxu0 0.0
        %544 = vmatprep.subr.mxu0 0.0
        %545 = vmatpush1.msra.mxu0 0.0
        %546 = vmatprep.subr.mxu0 0.0
        %547 = vmatpush1.msra.mxu0 0.0
        %548 = vmatprep.subr.mxu0 0.0
        %549 = vmatpush1.msra.mxu0 0.0
        %550 = vmatprep.subr.mxu0 0.0
        %551 = vmatpush1.msra.mxu0 0.0
        %552 = vmatprep.subr.mxu0 0.0
        %553 = vmatpush1.msra.mxu0 0.0
        %554 = vmatprep.subr.mxu0 0.0
        %555 = vmatpush1.msra.mxu0 0.0
        %556 = vmatprep.subr.mxu0 0.0
        %557 = vmatpush1.msra.mxu0 0.0
        %558 = vmatprep.subr.mxu0 0.0
        %559 = vmatpush1.msra.mxu0 0.0
        %560 = vmatprep.subr.mxu0 0.0
        %561 = vmatpush1.msra.mxu0 0.0
        %562 = vmatprep.subr.mxu0 0.0
        %563 = vmatpush1.msra.mxu0 0.0
        %564 = vmatprep.subr.mxu0 0.0
        %565 = vmatpush1.msra.mxu0 0.0
        %566 = vmatprep.subr.mxu0 %v534
        %567 = vmatpush1.msra.mxu0 %v531
        %568 = vmatprep.subr.mxu0 0.0
        %569 = vmatpush2.msra.mxu0 0.0
        %570 = vmatprep.subr.mxu0 0.0
        %571 = vmatpush2.msra.mxu0 0.0
        %572 = vmatprep.subr.mxu0 0.0
        %573 = vmatpush2.msra.mxu0 0.0
        %574 = vmatprep.subr.mxu0 0.0
        %575 = vmatpush2.msra.mxu0 0.0
        %576 = vmatprep.subr.mxu0 0.0
        %577 = vmatpush2.msra.mxu0 0.0
        %578 = vmatprep.subr.mxu0 0.0
        %579 = vmatpush2.msra.mxu0 0.0
        %580 = vmatprep.subr.mxu0 0.0
        %581 = vmatpush2.msra.mxu0 0.0
        %582 = vmatprep.subr.mxu0 0.0
        %583 = vmatpush2.msra.mxu0 0.0
        %584 = vmatprep.subr.mxu0 0.0
        %585 = vmatpush2.msra.mxu0 0.0
        %586 = vmatprep.subr.mxu0 0.0
        %587 = vmatpush2.msra.mxu0 0.0
        %588 = vmatprep.subr.mxu0 0.0
        %589 = vmatpush2.msra.mxu0 0.0
        %590 = vmatprep.subr.mxu0 0.0
        %591 = vmatpush2.msra.mxu0 0.0
        %592 = vmatprep.subr.mxu0 0.0
        %593 = vmatpush2.msra.mxu0 0.0
        %594 = vmatprep.subr.mxu0 0.0
        %595 = vmatpush2.msra.mxu0 0.0
        %596 = vmatprep.subr.mxu0 0.0
        %597 = vmatpush2.msra.mxu0 0.0
        %598 = vmatprep.subr.mxu0 0.0
        %599 = vmatpush2.msra.mxu0 0.0
        %600 = vmatprep.mubr.f32.mxu0 0.0
        %601 = vmatmul.mubr.f32.gmra.mxu0 %v528
        %v602 = vpop.f32.mrf.mxu0
        %v603 = vadd.f32 %v187, %v602
        %v604 = vpop.f32.mrf.mxu0
        %v605 = vadd.f32 %v196, %v604
        %606 = vdwg.mxu0
        %v609 = vcombine.low %v603, %v605
        %611 = vst [vmem:[%s186] sm:$0xff] %v609
        %s612 = sand.u32 %s96, 1
        %s613 = scalar_lea.sflag [#allocation4], %s612
        %s614 = sand.u32 %s96, 1
        %s615 = smul.addr %s614, 8
        %s616 = scalar_lea.vmem [#allocation5], %s615
        // Predicated region
        $region37: #{tpu_custom_call.1} parent=31 // pred_check
          %p617 = pneg %p106
        $region38: #{tpu_custom_call.1} parent=31 // pred_check_branch
          %619 = sbr.rel (%p617) target = $region40
        $region39: #{tpu_custom_call.1} parent=31 // pred_region
          %s621 = ssub.s32 128, 128
          %622 = vsyncadd %s613, %s621
          %s623 = smul.addr %s20, 2
          %s624 = smul.addr %s623, 64
          %s625 = scalar_lea.hbm %s3, %s624
          %s627 = sshll.u32 %s616, 4
          %s628 = int_to_ptr.vmem [resolvable:$true] %s627
          %630 = dma.vmem_to_hbm [thread:$0]  %s628, 128, %s625, %s613
        $region40: #{tpu_custom_call.1} parent=31 // pred_fallthru
          _
      $region32: #{tpu_custom_call.1} parent=5 // pred_fallthru
        _
      %p631 = scmp.le.s32.totalorder 2, %s15
      // Predicated region
      $region41: #{tpu_custom_call.1} parent=5 // pred_check
        %p632 = pneg %p631
      $region42: #{tpu_custom_call.1} parent=5 // pred_check_branch
        %634 = sbr.rel (%p632) target = $region44
      $region43: #{tpu_custom_call.1} parent=5 // pred_region
        %s635 = ssub.s32 %s15, 2
        // Predicated region
        $region45: #{tpu_custom_call.1} parent=43 // pred_check
          %p636 = pneg %p112
        $region46: #{tpu_custom_call.1} parent=43 // pred_check_branch
          %638 = sbr.rel (%p636) target = $region48
        $region47: #{tpu_custom_call.1} parent=43 // pred_region
          %s639 = sand.u32 %s97, 1
          %s640 = scalar_lea.sflag [#allocation4], %s639
          %s641 = sand.u32 %s97, 1
          %s642 = smul.addr %s641, 8
          %s643 = scalar_lea.vmem [#allocation5], %s642
          %644 = dma.done %s640, 128
        $region48: #{tpu_custom_call.1} parent=43 // pred_fallthru
          _
      $region44: #{tpu_custom_call.1} parent=5 // pred_fallthru
        _
    $region6: #{tpu_custom_call.1} parent=1 // loop_footer
      %s19 = sadd.s32 1, %s15
    $region7: #{tpu_custom_call.1} parent=1 // loop_footer_branch
      %14 = sbr.rel target = $region3
    $region8: #{tpu_custom_call.1} parent=1 // loop_exit
      _
    %645 = vsyncpa [#allocation3], 1
    %s646 = scalar_lea.sflag [#allocation3], 1
    %647 = vsyncpa %s646, 1
    %648 = vsyncpa [#allocation4], 1
    %s649 = scalar_lea.sflag [#allocation4], 1
    %650 = vsyncpa %s649, 1

</llo_original>
